<compile_context>
chip_gen: v7x
topology: tpu7x:2x2x1
jax: 0.10.0
libtpu: 0.0.40
codegen_flags: <defaults>
</compile_context>

<pallas_src>
import jax
import jax.numpy as jnp
from jax import lax
from jax.experimental import pallas as pl
from jax.experimental.pallas import tpu as pltpu

# ---- hyperparameters (small, consistent with the PyTorch module) ----
VOCAB = 50          # len(sx)
EMB = 100           # nn.Embedding(len(sx), 100)
HIDDEN = 32         # hidden_size
BATCH = 2
MAX_LEN = 8
# num_layers=1 -> nn.LSTM dropout is a no-op; bidirectional=True.


def bilstm_kernel(xg_ref, whh_ref, wfc_ref, bfc_ref, out_ref):
    """Fused BiLSTM recurrence + FC + log_softmax.

    xg_ref : [T*B, 8H] precomputed input projections (+ folded biases).
             Column layout is gate-major: [i_f|i_b|f_f|f_b|g_f|g_b|o_f|o_b].
             The backward-direction columns of row-block t were computed from
             x[T-1-t], so a single loop index t feeds both directions.
    whh_ref: [2H, 8H] block-diagonal recurrent weights in the same layout
             (rows 0:H -> forward hidden, rows H:2H -> backward hidden).
    wfc_ref: [2H, 2] final Linear weight (transposed), bfc_ref: [1, 2] bias.
    out_ref: [B, 2] log-probabilities.
    """
    B = out_ref.shape[0]
    H = whh_ref.shape[0] // 2
    T = xg_ref.shape[0] // B

    whh = whh_ref[...]                      # load once, reused every step
    wfc = wfc_ref[...]
    bfc = bfc_ref[...]

    # Hoisted lane mask: g-gate lanes (tanh) vs i/f/o lanes (sigmoid).
    lane = lax.broadcasted_iota(jnp.int32, (B, 8 * H), 1)
    g_mask = (lane >= 4 * H) & (lane < 6 * H)

    h = jnp.zeros((B, 2 * H), jnp.float32)  # [h_fw | h_bw]
    c = jnp.zeros((B, 2 * H), jnp.float32)  # [c_fw | c_bw]

    for t in range(T):                      # T = 8 static -> fully unrolled
        gates = xg_ref[t * B:(t + 1) * B, :] + jnp.dot(
            h, whh, preferred_element_type=jnp.float32)          # [B, 8H]
        act = jnp.where(g_mask, jnp.tanh(gates), jax.nn.sigmoid(gates))
        i = act[:, 0 * 2 * H:1 * 2 * H]     # [i_f | i_b]
        f = act[:, 1 * 2 * H:2 * 2 * H]     # [f_f | f_b]
        g = act[:, 2 * 2 * H:3 * 2 * H]     # [g_f | g_b]
        o = act[:, 3 * 2 * H:4 * 2 * H]     # [o_f | o_b]
        c = f * c + i * g
        h = o * jnp.tanh(c)

    # After the last step: h[:, :H] == torch h_n[-2], h[:, H:] == torch h_n[-1]
    logits = jnp.dot(h, wfc, preferred_element_type=jnp.float32) + bfc   # [B, 2]

    # log_softmax along the last axis
    m = jnp.max(logits, axis=-1, keepdims=True)
    lse = m + jnp.log(jnp.sum(jnp.exp(logits - m), axis=-1, keepdims=True))
    # TODO(synk): the PyTorch forward also print()s softmax(out); stdout side
    # effect is omitted (softmax == exp of this output on the host if needed).
    out_ref[...] = logits - lse


def _pack_inputs(tokens, params):
    """Embedding lookup + hoisted input projection + weight packing (JAX glue)."""
    H = HIDDEN
    B, T = tokens.shape
    hi = jax.lax.Precision.HIGHEST

    x = jnp.take(params["embedding"], tokens, axis=0)          # [B, T, E]
    x = jnp.transpose(x, (1, 0, 2)).astype(jnp.float32)        # [T, B, E]

    # Fold b_ih + b_hh into the one-shot input projection (done once, not per step).
    b_f = params["b_ih_f"] + params["b_hh_f"]                  # [4H]
    b_b = params["b_ih_b"] + params["b_hh_b"]

    p_fw = jnp.dot(x, params["w_ih_f"].T, precision=hi) + b_f          # [T, B, 4H]
    p_bw = jnp.dot(x[::-1], params["w_ih_b"].T, precision=hi) + b_b    # time-reversed

    # Gate-major interleave of directions: [i_f|i_b|f_f|f_b|g_f|g_b|o_f|o_b]
    xg = jnp.stack([p_fw.reshape(T, B, 4, H),
                    p_bw.reshape(T, B, 4, H)], axis=3)          # [T, B, 4, 2, H]
    xg = xg.reshape(T * B, 8 * H)                               # [T*B, 8H]

    # Block-diagonal recurrent weight in the same gate-major layout: [2H, 8H]
    wf = params["w_hh_f"].T.reshape(H, 4, H)                    # [H, gate, H]
    wb = params["w_hh_b"].T.reshape(H, 4, H)
    z = jnp.zeros_like(wf)
    whh = jnp.concatenate(
        [jnp.stack([wf, z], axis=2).reshape(H, 8 * H),          # rows for h_fw
         jnp.stack([z, wb], axis=2).reshape(H, 8 * H)],         # rows for h_bw
        axis=0)

    wfc = params["w_fc"].T                                      # [2H, 2]
    bfc = params["b_fc"].reshape(1, 2)
    return xg, whh, wfc, bfc


@jax.jit
def mymodel_forward(tokens, params):
    xg, whh, wfc, bfc = _pack_inputs(tokens, params)
    vmem = pl.BlockSpec(memory_space=pltpu.MemorySpace.VMEM)
    return pl.pallas_call(
        bilstm_kernel,
        out_shape=jax.ShapeDtypeStruct((tokens.shape[0], 2), jnp.float32),
        in_specs=[vmem] * 4,
        out_specs=vmem,
    )(xg, whh, wfc, bfc)


def reference_forward(tokens, params):
    """Pure-JAX reference matching the PyTorch module semantics."""
    H = HIDDEN
    B, T = tokens.shape
    hi = jax.lax.Precision.HIGHEST
    x = jnp.take(params["embedding"], tokens, axis=0).astype(jnp.float32)  # [B, T, E]

    def cell(h, c, x_t, w_ih, w_hh, b):
        gates = (jnp.dot(x_t, w_ih.T, precision=hi)
                 + jnp.dot(h, w_hh.T, precision=hi) + b)
        i = jax.nn.sigmoid(gates[:, 0:H])
        f = jax.nn.sigmoid(gates[:, H:2 * H])
        g = jnp.tanh(gates[:, 2 * H:3 * H])
        o = jax.nn.sigmoid(gates[:, 3 * H:4 * H])
        c = f * c + i * g
        return o * jnp.tanh(c), c

    h_f = jnp.zeros((B, H), jnp.float32); c_f = jnp.zeros((B, H), jnp.float32)
    h_b = jnp.zeros((B, H), jnp.float32); c_b = jnp.zeros((B, H), jnp.float32)
    b_f = params["b_ih_f"] + params["b_hh_f"]
    b_b = params["b_ih_b"] + params["b_hh_b"]
    for t in range(T):
        h_f, c_f = cell(h_f, c_f, x[:, t], params["w_ih_f"], params["w_hh_f"], b_f)
        h_b, c_b = cell(h_b, c_b, x[:, T - 1 - t], params["w_ih_b"], params["w_hh_b"], b_b)
    feat = jnp.concatenate([h_f, h_b], axis=-1)
    logits = jnp.dot(feat, params["w_fc"].T, precision=hi) + params["b_fc"]
    return jax.nn.log_softmax(logits, axis=-1)


def init_params(key):
    """Deterministic synthetic parameters in PyTorch layouts."""
    ks = jax.random.split(key, 11)
    H = HIDDEN
    lb = 1.0 / jnp.sqrt(jnp.float32(H))          # LSTM init bound
    fb = 1.0 / jnp.sqrt(jnp.float32(2 * H))      # Linear init bound

    def u(k, shape, b):
        return jax.random.uniform(k, shape, jnp.float32, -b, b)

    return dict(
        embedding=jax.random.normal(ks[0], (VOCAB, EMB), jnp.float32),
        # PyTorch layouts: weight_ih [4H, E], weight_hh [4H, H], biases [4H]; gates i,f,g,o
        w_ih_f=u(ks[1], (4 * H, EMB), lb), w_hh_f=u(ks[2], (4 * H, H), lb),
        b_ih_f=u(ks[3], (4 * H,), lb),     b_hh_f=u(ks[4], (4 * H,), lb),
        w_ih_b=u(ks[5], (4 * H, EMB), lb), w_hh_b=u(ks[6], (4 * H, H), lb),
        b_ih_b=u(ks[7], (4 * H,), lb),     b_hh_b=u(ks[8], (4 * H,), lb),
        w_fc=u(ks[9], (2, 2 * H), fb),     b_fc=u(ks[10], (2,), fb),
    )


if __name__ == "__main__":
    key = jax.random.PRNGKey(0)
    k_tok, k_par = jax.random.split(key)
    tokens = jax.random.randint(k_tok, (BATCH, MAX_LEN), 0, VOCAB, dtype=jnp.int32)
    params = init_params(k_par)

    log_probs = mymodel_forward(tokens, params)
    jax.block_until_ready(log_probs)

    assert log_probs.shape == (BATCH, 2)
    assert bool(jnp.all(jnp.isfinite(log_probs)))
    # rows of exp(log_softmax) must sum to 1
    assert bool(jnp.allclose(jnp.exp(log_probs).sum(-1), 1.0, atol=1e-5))

    # cross-check against a pure-JAX reference of the PyTorch forward
    ref = reference_forward(tokens, params)
    assert bool(jnp.allclose(log_probs, ref, atol=2e-2, rtol=2e-2))

    print("KERNEL_OK")
</pallas_src>

<mosaic_0001>
module attributes {stable_mosaic.version = 11 : i64} {
  func.func @bilstm_kernel(%arg0: memref<16x256xf32, #tpu.memory_space<vmem>>, %arg1: memref<64x256xf32, #tpu.memory_space<vmem>>, %arg2: memref<64x2xf32, #tpu.memory_space<vmem>>, %arg3: memref<1x2xf32, #tpu.memory_space<vmem>>, %arg4: memref<2x2xf32, #tpu.memory_space<vmem>>) attributes {dimension_semantics = [], scalar_prefetch = 0 : i64, scratch_operands = 0 : i64, tpu.core_type = #tpu.core_type<tc>} {
    %c0 = arith.constant 0 : index
    %c0_0 = arith.constant 0 : index
    %0 = vector.load %arg1[%c0, %c0_0] : memref<64x256xf32, #tpu.memory_space<vmem>>, vector<64x256xf32>
    %c0_1 = arith.constant 0 : index
    %c0_2 = arith.constant 0 : index
    %1 = vector.load %arg2[%c0_1, %c0_2] : memref<64x2xf32, #tpu.memory_space<vmem>>, vector<64x2xf32>
    %c0_3 = arith.constant 0 : index
    %c0_4 = arith.constant 0 : index
    %2 = vector.load %arg3[%c0_3, %c0_4] : memref<1x2xf32, #tpu.memory_space<vmem>>, vector<1x2xf32>
    %3 = tpu.iota {dimensions = array<i32: 1>} : vector<2x256xi32>
    %c128_i32 = arith.constant 128 : i32
    %4 = vector.broadcast %c128_i32 : i32 to vector<2x256xi32>
    %5 = arith.cmpi sge, %3, %4 : vector<2x256xi32>
    %c192_i32 = arith.constant 192 : i32
    %6 = vector.broadcast %c192_i32 : i32 to vector<2x256xi32>
    %7 = arith.cmpi slt, %3, %6 : vector<2x256xi32>
    %8 = arith.andi %5, %7 : vector<2x256xi1>
    %cst = arith.constant 0.000000e+00 : f32
    %9 = vector.broadcast %cst : f32 to vector<2x64xf32>
    %cst_5 = arith.constant 0.000000e+00 : f32
    %10 = vector.broadcast %cst_5 : f32 to vector<2x64xf32>
    %c0_6 = arith.constant 0 : index
    %c0_7 = arith.constant 0 : index
    %11 = vector.load %arg0[%c0_6, %c0_7] : memref<16x256xf32, #tpu.memory_space<vmem>>, vector<2x256xf32>
    %cst_8 = arith.constant dense<0.000000e+00> : vector<2x256xf32>
    %12 = tpu.matmul %9, %0, %cst_8 {dimension_numbers = #tpu.dot_dimension_numbers<[1], [0], [0], [1], [0, 0, 1, 1], [], []>} : vector<2x64xf32>, vector<64x256xf32>, vector<2x256xf32> -> vector<2x256xf32>
    %13 = arith.addf %11, %12 : vector<2x256xf32>
    %14 = math.tanh %13 : vector<2x256xf32>
    %15 = arith.negf %13 : vector<2x256xf32>
    %16 = math.exp %15 : vector<2x256xf32>
    %cst_9 = arith.constant 1.000000e+00 : f32
    %17 = vector.broadcast %cst_9 : f32 to vector<2x256xf32>
    %18 = arith.addf %17, %16 : vector<2x256xf32>
    %19 = arith.divf %17, %18 : vector<2x256xf32>
    %20 = arith.select %8, %14, %19 : vector<2x256xi1>, vector<2x256xf32>
    %21 = vector.extract_strided_slice %20 {offsets = [0, 0], sizes = [2, 64], strides = [1, 1]} : vector<2x256xf32> to vector<2x64xf32>
    %22 = vector.extract_strided_slice %20 {offsets = [0, 64], sizes = [2, 64], strides = [1, 1]} : vector<2x256xf32> to vector<2x64xf32>
    %23 = vector.extract_strided_slice %20 {offsets = [0, 128], sizes = [2, 64], strides = [1, 1]} : vector<2x256xf32> to vector<2x64xf32>
    %24 = vector.extract_strided_slice %20 {offsets = [0, 192], sizes = [2, 64], strides = [1, 1]} : vector<2x256xf32> to vector<2x64xf32>
    %25 = arith.mulf %22, %10 : vector<2x64xf32>
    %26 = arith.mulf %21, %23 : vector<2x64xf32>
    %27 = arith.addf %25, %26 : vector<2x64xf32>
    %28 = math.tanh %27 : vector<2x64xf32>
    %29 = arith.mulf %24, %28 : vector<2x64xf32>
    %c2 = arith.constant 2 : index
    %c0_10 = arith.constant 0 : index
    %30 = vector.load %arg0[%c2, %c0_10] : memref<16x256xf32, #tpu.memory_space<vmem>>, vector<2x256xf32>
    %cst_11 = arith.constant dense<0.000000e+00> : vector<2x256xf32>
    %31 = tpu.matmul %29, %0, %cst_11 {dimension_numbers = #tpu.dot_dimension_numbers<[1], [0], [0], [1], [0, 0, 1, 1], [], []>} : vector<2x64xf32>, vector<64x256xf32>, vector<2x256xf32> -> vector<2x256xf32>
    %32 = arith.addf %30, %31 : vector<2x256xf32>
    %33 = math.tanh %32 : vector<2x256xf32>
    %34 = arith.negf %32 : vector<2x256xf32>
    %35 = math.exp %34 : vector<2x256xf32>
    %cst_12 = arith.constant 1.000000e+00 : f32
    %36 = vector.broadcast %cst_12 : f32 to vector<2x256xf32>
    %37 = arith.addf %36, %35 : vector<2x256xf32>
    %38 = arith.divf %36, %37 : vector<2x256xf32>
    %39 = arith.select %8, %33, %38 : vector<2x256xi1>, vector<2x256xf32>
    %40 = vector.extract_strided_slice %39 {offsets = [0, 0], sizes = [2, 64], strides = [1, 1]} : vector<2x256xf32> to vector<2x64xf32>
    %41 = vector.extract_strided_slice %39 {offsets = [0, 64], sizes = [2, 64], strides = [1, 1]} : vector<2x256xf32> to vector<2x64xf32>
    %42 = vector.extract_strided_slice %39 {offsets = [0, 128], sizes = [2, 64], strides = [1, 1]} : vector<2x256xf32> to vector<2x64xf32>
    %43 = vector.extract_strided_slice %39 {offsets = [0, 192], sizes = [2, 64], strides = [1, 1]} : vector<2x256xf32> to vector<2x64xf32>
    %44 = arith.mulf %41, %27 : vector<2x64xf32>
    %45 = arith.mulf %40, %42 : vector<2x64xf32>
    %46 = arith.addf %44, %45 : vector<2x64xf32>
    %47 = math.tanh %46 : vector<2x64xf32>
    %48 = arith.mulf %43, %47 : vector<2x64xf32>
    %c4 = arith.constant 4 : index
    %c0_13 = arith.constant 0 : index
    %49 = vector.load %arg0[%c4, %c0_13] : memref<16x256xf32, #tpu.memory_space<vmem>>, vector<2x256xf32>
    %cst_14 = arith.constant dense<0.000000e+00> : vector<2x256xf32>
    %50 = tpu.matmul %48, %0, %cst_14 {dimension_numbers = #tpu.dot_dimension_numbers<[1], [0], [0], [1], [0, 0, 1, 1], [], []>} : vector<2x64xf32>, vector<64x256xf32>, vector<2x256xf32> -> vector<2x256xf32>
    %51 = arith.addf %49, %50 : vector<2x256xf32>
    %52 = math.tanh %51 : vector<2x256xf32>
    %53 = arith.negf %51 : vector<2x256xf32>
    %54 = math.exp %53 : vector<2x256xf32>
    %cst_15 = arith.constant 1.000000e+00 : f32
    %55 = vector.broadcast %cst_15 : f32 to vector<2x256xf32>
    %56 = arith.addf %55, %54 : vector<2x256xf32>
    %57 = arith.divf %55, %56 : vector<2x256xf32>
    %58 = arith.select %8, %52, %57 : vector<2x256xi1>, vector<2x256xf32>
    %59 = vector.extract_strided_slice %58 {offsets = [0, 0], sizes = [2, 64], strides = [1, 1]} : vector<2x256xf32> to vector<2x64xf32>
    %60 = vector.extract_strided_slice %58 {offsets = [0, 64], sizes = [2, 64], strides = [1, 1]} : vector<2x256xf32> to vector<2x64xf32>
    %61 = vector.extract_strided_slice %58 {offsets = [0, 128], sizes = [2, 64], strides = [1, 1]} : vector<2x256xf32> to vector<2x64xf32>
    %62 = vector.extract_strided_slice %58 {offsets = [0, 192], sizes = [2, 64], strides = [1, 1]} : vector<2x256xf32> to vector<2x64xf32>
    %63 = arith.mulf %60, %46 : vector<2x64xf32>
    %64 = arith.mulf %59, %61 : vector<2x64xf32>
    %65 = arith.addf %63, %64 : vector<2x64xf32>
    %66 = math.tanh %65 : vector<2x64xf32>
    %67 = arith.mulf %62, %66 : vector<2x64xf32>
    %c6 = arith.constant 6 : index
    %c0_16 = arith.constant 0 : index
    %68 = vector.load %arg0[%c6, %c0_16] : memref<16x256xf32, #tpu.memory_space<vmem>>, vector<2x256xf32>
    %cst_17 = arith.constant dense<0.000000e+00> : vector<2x256xf32>
    %69 = tpu.matmul %67, %0, %cst_17 {dimension_numbers = #tpu.dot_dimension_numbers<[1], [0], [0], [1], [0, 0, 1, 1], [], []>} : vector<2x64xf32>, vector<64x256xf32>, vector<2x256xf32> -> vector<2x256xf32>
    %70 = arith.addf %68, %69 : vector<2x256xf32>
    %71 = math.tanh %70 : vector<2x256xf32>
    %72 = arith.negf %70 : vector<2x256xf32>
    %73 = math.exp %72 : vector<2x256xf32>
    %cst_18 = arith.constant 1.000000e+00 : f32
    %74 = vector.broadcast %cst_18 : f32 to vector<2x256xf32>
    %75 = arith.addf %74, %73 : vector<2x256xf32>
    %76 = arith.divf %74, %75 : vector<2x256xf32>
    %77 = arith.select %8, %71, %76 : vector<2x256xi1>, vector<2x256xf32>
    %78 = vector.extract_strided_slice %77 {offsets = [0, 0], sizes = [2, 64], strides = [1, 1]} : vector<2x256xf32> to vector<2x64xf32>
    %79 = vector.extract_strided_slice %77 {offsets = [0, 64], sizes = [2, 64], strides = [1, 1]} : vector<2x256xf32> to vector<2x64xf32>
    %80 = vector.extract_strided_slice %77 {offsets = [0, 128], sizes = [2, 64], strides = [1, 1]} : vector<2x256xf32> to vector<2x64xf32>
    %81 = vector.extract_strided_slice %77 {offsets = [0, 192], sizes = [2, 64], strides = [1, 1]} : vector<2x256xf32> to vector<2x64xf32>
    %82 = arith.mulf %79, %65 : vector<2x64xf32>
    %83 = arith.mulf %78, %80 : vector<2x64xf32>
    %84 = arith.addf %82, %83 : vector<2x64xf32>
    %85 = math.tanh %84 : vector<2x64xf32>
    %86 = arith.mulf %81, %85 : vector<2x64xf32>
    %c8 = arith.constant 8 : index
    %c0_19 = arith.constant 0 : index
    %87 = vector.load %arg0[%c8, %c0_19] : memref<16x256xf32, #tpu.memory_space<vmem>>, vector<2x256xf32>
    %cst_20 = arith.constant dense<0.000000e+00> : vector<2x256xf32>
    %88 = tpu.matmul %86, %0, %cst_20 {dimension_numbers = #tpu.dot_dimension_numbers<[1], [0], [0], [1], [0, 0, 1, 1], [], []>} : vector<2x64xf32>, vector<64x256xf32>, vector<2x256xf32> -> vector<2x256xf32>
    %89 = arith.addf %87, %88 : vector<2x256xf32>
    %90 = math.tanh %89 : vector<2x256xf32>
    %91 = arith.negf %89 : vector<2x256xf32>
    %92 = math.exp %91 : vector<2x256xf32>
    %cst_21 = arith.constant 1.000000e+00 : f32
    %93 = vector.broadcast %cst_21 : f32 to vector<2x256xf32>
    %94 = arith.addf %93, %92 : vector<2x256xf32>
    %95 = arith.divf %93, %94 : vector<2x256xf32>
    %96 = arith.select %8, %90, %95 : vector<2x256xi1>, vector<2x256xf32>
    %97 = vector.extract_strided_slice %96 {offsets = [0, 0], sizes = [2, 64], strides = [1, 1]} : vector<2x256xf32> to vector<2x64xf32>
    %98 = vector.extract_strided_slice %96 {offsets = [0, 64], sizes = [2, 64], strides = [1, 1]} : vector<2x256xf32> to vector<2x64xf32>
    %99 = vector.extract_strided_slice %96 {offsets = [0, 128], sizes = [2, 64], strides = [1, 1]} : vector<2x256xf32> to vector<2x64xf32>
    %100 = vector.extract_strided_slice %96 {offsets = [0, 192], sizes = [2, 64], strides = [1, 1]} : vector<2x256xf32> to vector<2x64xf32>
    %101 = arith.mulf %98, %84 : vector<2x64xf32>
    %102 = arith.mulf %97, %99 : vector<2x64xf32>
    %103 = arith.addf %101, %102 : vector<2x64xf32>
    %104 = math.tanh %103 : vector<2x64xf32>
    %105 = arith.mulf %100, %104 : vector<2x64xf32>
    %c10 = arith.constant 10 : index
    %c0_22 = arith.constant 0 : index
    %106 = vector.load %arg0[%c10, %c0_22] : memref<16x256xf32, #tpu.memory_space<vmem>>, vector<2x256xf32>
    %cst_23 = arith.constant dense<0.000000e+00> : vector<2x256xf32>
    %107 = tpu.matmul %105, %0, %cst_23 {dimension_numbers = #tpu.dot_dimension_numbers<[1], [0], [0], [1], [0, 0, 1, 1], [], []>} : vector<2x64xf32>, vector<64x256xf32>, vector<2x256xf32> -> vector<2x256xf32>
    %108 = arith.addf %106, %107 : vector<2x256xf32>
    %109 = math.tanh %108 : vector<2x256xf32>
    %110 = arith.negf %108 : vector<2x256xf32>
    %111 = math.exp %110 : vector<2x256xf32>
    %cst_24 = arith.constant 1.000000e+00 : f32
    %112 = vector.broadcast %cst_24 : f32 to vector<2x256xf32>
    %113 = arith.addf %112, %111 : vector<2x256xf32>
    %114 = arith.divf %112, %113 : vector<2x256xf32>
    %115 = arith.select %8, %109, %114 : vector<2x256xi1>, vector<2x256xf32>
    %116 = vector.extract_strided_slice %115 {offsets = [0, 0], sizes = [2, 64], strides = [1, 1]} : vector<2x256xf32> to vector<2x64xf32>
    %117 = vector.extract_strided_slice %115 {offsets = [0, 64], sizes = [2, 64], strides = [1, 1]} : vector<2x256xf32> to vector<2x64xf32>
    %118 = vector.extract_strided_slice %115 {offsets = [0, 128], sizes = [2, 64], strides = [1, 1]} : vector<2x256xf32> to vector<2x64xf32>
    %119 = vector.extract_strided_slice %115 {offsets = [0, 192], sizes = [2, 64], strides = [1, 1]} : vector<2x256xf32> to vector<2x64xf32>
    %120 = arith.mulf %117, %103 : vector<2x64xf32>
    %121 = arith.mulf %116, %118 : vector<2x64xf32>
    %122 = arith.addf %120, %121 : vector<2x64xf32>
    %123 = math.tanh %122 : vector<2x64xf32>
    %124 = arith.mulf %119, %123 : vector<2x64xf32>
    %c12 = arith.constant 12 : index
    %c0_25 = arith.constant 0 : index
    %125 = vector.load %arg0[%c12, %c0_25] : memref<16x256xf32, #tpu.memory_space<vmem>>, vector<2x256xf32>
    %cst_26 = arith.constant dense<0.000000e+00> : vector<2x256xf32>
    %126 = tpu.matmul %124, %0, %cst_26 {dimension_numbers = #tpu.dot_dimension_numbers<[1], [0], [0], [1], [0, 0, 1, 1], [], []>} : vector<2x64xf32>, vector<64x256xf32>, vector<2x256xf32> -> vector<2x256xf32>
    %127 = arith.addf %125, %126 : vector<2x256xf32>
    %128 = math.tanh %127 : vector<2x256xf32>
    %129 = arith.negf %127 : vector<2x256xf32>
    %130 = math.exp %129 : vector<2x256xf32>
    %cst_27 = arith.constant 1.000000e+00 : f32
    %131 = vector.broadcast %cst_27 : f32 to vector<2x256xf32>
    %132 = arith.addf %131, %130 : vector<2x256xf32>
    %133 = arith.divf %131, %132 : vector<2x256xf32>
    %134 = arith.select %8, %128, %133 : vector<2x256xi1>, vector<2x256xf32>
    %135 = vector.extract_strided_slice %134 {offsets = [0, 0], sizes = [2, 64], strides = [1, 1]} : vector<2x256xf32> to vector<2x64xf32>
    %136 = vector.extract_strided_slice %134 {offsets = [0, 64], sizes = [2, 64], strides = [1, 1]} : vector<2x256xf32> to vector<2x64xf32>
    %137 = vector.extract_strided_slice %134 {offsets = [0, 128], sizes = [2, 64], strides = [1, 1]} : vector<2x256xf32> to vector<2x64xf32>
    %138 = vector.extract_strided_slice %134 {offsets = [0, 192], sizes = [2, 64], strides = [1, 1]} : vector<2x256xf32> to vector<2x64xf32>
    %139 = arith.mulf %136, %122 : vector<2x64xf32>
    %140 = arith.mulf %135, %137 : vector<2x64xf32>
    %141 = arith.addf %139, %140 : vector<2x64xf32>
    %142 = math.tanh %141 : vector<2x64xf32>
    %143 = arith.mulf %138, %142 : vector<2x64xf32>
    %c14 = arith.constant 14 : index
    %c0_28 = arith.constant 0 : index
    %144 = vector.load %arg0[%c14, %c0_28] : memref<16x256xf32, #tpu.memory_space<vmem>>, vector<2x256xf32>
    %cst_29 = arith.constant dense<0.000000e+00> : vector<2x256xf32>
    %145 = tpu.matmul %143, %0, %cst_29 {dimension_numbers = #tpu.dot_dimension_numbers<[1], [0], [0], [1], [0, 0, 1, 1], [], []>} : vector<2x64xf32>, vector<64x256xf32>, vector<2x256xf32> -> vector<2x256xf32>
    %146 = arith.addf %144, %145 : vector<2x256xf32>
    %147 = math.tanh %146 : vector<2x256xf32>
    %148 = arith.negf %146 : vector<2x256xf32>
    %149 = math.exp %148 : vector<2x256xf32>
    %cst_30 = arith.constant 1.000000e+00 : f32
    %150 = vector.broadcast %cst_30 : f32 to vector<2x256xf32>
    %151 = arith.addf %150, %149 : vector<2x256xf32>
    %152 = arith.divf %150, %151 : vector<2x256xf32>
    %153 = arith.select %8, %147, %152 : vector<2x256xi1>, vector<2x256xf32>
    %154 = vector.extract_strided_slice %153 {offsets = [0, 0], sizes = [2, 64], strides = [1, 1]} : vector<2x256xf32> to vector<2x64xf32>
    %155 = vector.extract_strided_slice %153 {offsets = [0, 64], sizes = [2, 64], strides = [1, 1]} : vector<2x256xf32> to vector<2x64xf32>
    %156 = vector.extract_strided_slice %153 {offsets = [0, 128], sizes = [2, 64], strides = [1, 1]} : vector<2x256xf32> to vector<2x64xf32>
    %157 = vector.extract_strided_slice %153 {offsets = [0, 192], sizes = [2, 64], strides = [1, 1]} : vector<2x256xf32> to vector<2x64xf32>
    %158 = arith.mulf %155, %141 : vector<2x64xf32>
    %159 = arith.mulf %154, %156 : vector<2x64xf32>
    %160 = arith.addf %158, %159 : vector<2x64xf32>
    %161 = math.tanh %160 : vector<2x64xf32>
    %162 = arith.mulf %157, %161 : vector<2x64xf32>
    %cst_31 = arith.constant dense<0.000000e+00> : vector<2x2xf32>
    %163 = tpu.matmul %162, %1, %cst_31 {dimension_numbers = #tpu.dot_dimension_numbers<[1], [0], [0], [1], [0, 0, 1, 1], [], []>} : vector<2x64xf32>, vector<64x2xf32>, vector<2x2xf32> -> vector<2x2xf32>
    %164 = vector.broadcast %2 : vector<1x2xf32> to vector<2x2xf32>
    %165 = arith.addf %163, %164 : vector<2x2xf32>
    %cst_32 = arith.constant dense<0xFF800000> : vector<2xf32>
    %166 = vector.multi_reduction <maximumf>, %165, %cst_32 [1] : vector<2x2xf32> to vector<2xf32>
    %167 = vector.shape_cast %166 : vector<2xf32> to vector<2x1xf32>
    %168 = vector.broadcast %167 : vector<2x1xf32> to vector<2x2xf32>
    %169 = arith.subf %165, %168 : vector<2x2xf32>
    %170 = math.exp %169 : vector<2x2xf32>
    %cst_33 = arith.constant dense<0.000000e+00> : vector<2xf32>
    %171 = vector.multi_reduction <add>, %170, %cst_33 [1] : vector<2x2xf32> to vector<2xf32>
    %172 = vector.shape_cast %171 : vector<2xf32> to vector<2x1xf32>
    %173 = math.log %172 : vector<2x1xf32>
    %174 = arith.addf %167, %173 : vector<2x1xf32>
    %175 = vector.broadcast %174 : vector<2x1xf32> to vector<2x2xf32>
    %176 = arith.subf %165, %175 : vector<2x2xf32>
    %c0_34 = arith.constant 0 : index
    %c0_35 = arith.constant 0 : index
    %177 = vector.load %arg4[%c0_34, %c0_35] : memref<2x2xf32, #tpu.memory_space<vmem>>, vector<2x2xf32>
    tpu.vector_store %arg4[%c0_34, %c0_35], %176 {strides = array<i32>} : memref<2x2xf32, #tpu.memory_space<vmem>>, vector<2x2xf32>,
    return
  }
}

</mosaic_0001>

<llo_original>
// kernel: mymodel_forward.1
$region0: #{mymodel_forward.1}
  #allocation0 [shape = 'u32[]', space=smem, size = 0x4, offset = 0x4, fixed_abs, tag = 'smem constant byte address 0x4 - core index']
  #allocation1 [shape = 'u32[144,128]{1,0:T(1,128)}', space=vmem, size = 0x12000, scoped, tag = 'internal scratch']
  %s0 = inlined_call_operand.vmem [shape: f32[16,256], index: 0, kind: input, shape index: {}]
  %s1 = inlined_call_operand.vmem [shape: f32[64,256], index: 1, kind: input, shape index: {}]
  %s2 = inlined_call_operand.vmem [shape: f32[64,2], index: 2, kind: input, shape index: {}]
  %s3 = inlined_call_operand.vmem [shape: f32[1,2], index: 3, kind: input, shape index: {}]
  %s4 = inlined_call_operand.hbm [shape: f32[2,2], index: 4, kind: output, shape index: {}]
  %s5 = sld [smem:[#allocation0]]
  $region26: #{mymodel_forward.1} parent=0
    _
  %s7 = ssub.s32 1, %s5
  %s8 = scalar_select 0, %s7, %s5
  $region1: #{mymodel_forward.1} parent=0
    #allocation2 [shape = 'u8[1024]{0}', space=vmem, size = 0x400, scoped, tag = 'output window, operand 0, single buffered']
    #allocation3 [shape = 's32[1]{0}', space=sflag, size = 0x4, scoped, tag = 'scoped memory for mymodel_forward.1']
    %9 = vsyncpa [#allocation3], 0
    // Predicated region
    $region2: #{mymodel_forward.1} parent=1 // pred_check
      _
    $region3: #{mymodel_forward.1} parent=1 // pred_check_branch
      %11 = sbr.rel (0) target = $region5
    $region4: #{mymodel_forward.1} parent=1 // pred_region
      _
    $region5: #{mymodel_forward.1} parent=1 // pred_fallthru
      _
    // Predicated region
    $region6: #{mymodel_forward.1} parent=1 // pred_check
      _
    $region7: #{mymodel_forward.1} parent=1 // pred_check_branch
      %13 = sbr.rel (0) target = $region9
    $region8: #{mymodel_forward.1} parent=1 // pred_region
      _
    $region9: #{mymodel_forward.1} parent=1 // pred_fallthru
      _
    // Predicated region
    $region10: #{mymodel_forward.1} parent=1 // pred_check
      _
    $region11: #{mymodel_forward.1} parent=1 // pred_check_branch
      %15 = sbr.rel (0) target = $region13
    $region12: #{mymodel_forward.1} parent=1 // pred_region
      _
    $region13: #{mymodel_forward.1} parent=1 // pred_fallthru
      _
    // Predicated region
    $region14: #{mymodel_forward.1} parent=1 // pred_check
      _
    $region15: #{mymodel_forward.1} parent=1 // pred_check_branch
      %17 = sbr.rel (0) target = $region17
    $region16: #{mymodel_forward.1} parent=1 // pred_region
      _
    $region17: #{mymodel_forward.1} parent=1 // pred_fallthru
      _
    %v18 = vld [vmem:[%s1] sm:$0xff]
    %v19 = vld [vmem:[%s1 + $0x8] sm:$0xff]
    %v20 = vld [vmem:[%s1 + $0x10] sm:$0xff]
    %v21 = vld [vmem:[%s1 + $0x18] sm:$0xff]
    %v22 = vld [vmem:[%s1 + $0x20] sm:$0xff]
    %v23 = vld [vmem:[%s1 + $0x28] sm:$0xff]
    %v24 = vld [vmem:[%s1 + $0x30] sm:$0xff]
    %v25 = vld [vmem:[%s1 + $0x38] sm:$0xff]
    %v26 = vld [vmem:[%s1 + $0x40] sm:$0xff]
    %v27 = vld [vmem:[%s1 + $0x48] sm:$0xff]
    %v28 = vld [vmem:[%s1 + $0x50] sm:$0xff]
    %v29 = vld [vmem:[%s1 + $0x58] sm:$0xff]
    %v30 = vld [vmem:[%s1 + $0x60] sm:$0xff]
    %v31 = vld [vmem:[%s1 + $0x68] sm:$0xff]
    %v32 = vld [vmem:[%s1 + $0x70] sm:$0xff]
    %v33 = vld [vmem:[%s1 + $0x78] sm:$0xff]
    %v34 = vld [vmem:[%s2] sm:$0xff]
    %v35 = vld [vmem:[%s2 + $0x8] sm:$0xff]
    %v36 = vld [vmem:[%s2 + $0x10] sm:$0xff]
    %v37 = vld [vmem:[%s2 + $0x18] sm:$0xff]
    %v38 = vld [vmem:[%s2 + $0x20] sm:$0xff]
    %v39 = vld [vmem:[%s2 + $0x28] sm:$0xff]
    %v40 = vld [vmem:[%s2 + $0x30] sm:$0xff]
    %v41 = vld [vmem:[%s2 + $0x38] sm:$0xff]
    %v42 = vld [vmem:[%s3] sm:$0x1]
    %v43 = vlaneseq
    %v44 = vand.u32 %v43, 127
    %v45 = vadd.s32 %v44, 128
    %vm46 = vcmp.ge.s32.totalorder %v44, 128
    %vm47 = vcmp.ge.s32.totalorder %v45, 128
    %vm48 = vcmp.lt.s32.totalorder %v44, 192
    %vm49 = vcmp.lt.s32.totalorder %v45, 192
    %vm50 = vmand %vm46, %vm48
    %vm51 = vmand %vm47, %vm49
    %v52 = vld [vmem:[%s0] sm:$0x3]
    %v53 = vld [vmem:[%s0 + $0x8] sm:$0x3]
    %vm54 = vcmask 523264
    %v56 = vsel %vm54, 0.0, 0
    %58 = vmatprep.subr.mxu0 %v19
    %59 = vmatpush1.msra.mxu0 %v18
    %60 = vmatprep.subr.mxu0 %v21
    %61 = vmatpush1.msra.mxu0 %v20
    %62 = vmatprep.subr.mxu0 %v23
    %63 = vmatpush1.msra.mxu0 %v22
    %64 = vmatprep.subr.mxu0 %v25
    %65 = vmatpush1.msra.mxu0 %v24
    %66 = vmatprep.subr.mxu0 %v27
    %67 = vmatpush1.msra.mxu0 %v26
    %68 = vmatprep.subr.mxu0 %v29
    %69 = vmatpush1.msra.mxu0 %v28
    %70 = vmatprep.subr.mxu0 %v31
    %71 = vmatpush1.msra.mxu0 %v30
    %72 = vmatprep.subr.mxu0 %v33
    %73 = vmatpush1.msra.mxu0 %v32
    %74 = vmatprep.subr.mxu0 0.0
    %75 = vmatpush1.msra.mxu0 0.0
    %76 = vmatprep.subr.mxu0 0.0
    %77 = vmatpush1.msra.mxu0 0.0
    %78 = vmatprep.subr.mxu0 0.0
    %79 = vmatpush1.msra.mxu0 0.0
    %80 = vmatprep.subr.mxu0 0.0
    %81 = vmatpush1.msra.mxu0 0.0
    %82 = vmatprep.subr.mxu0 0.0
    %83 = vmatpush1.msra.mxu0 0.0
    %84 = vmatprep.subr.mxu0 0.0
    %85 = vmatpush1.msra.mxu0 0.0
    %86 = vmatprep.subr.mxu0 0.0
    %87 = vmatpush1.msra.mxu0 0.0
    %88 = vmatprep.subr.mxu0 0.0
    %89 = vmatpush1.msra.mxu0 0.0
    %90 = vmatprep.subr.mxu0 0.0
    %91 = vmatpush1.msra.mxu0 0.0
    %92 = vmatprep.subr.mxu0 0.0
    %93 = vmatpush1.msra.mxu0 0.0
    %94 = vmatprep.subr.mxu0 0.0
    %95 = vmatpush1.msra.mxu0 0.0
    %96 = vmatprep.subr.mxu0 0.0
    %97 = vmatpush1.msra.mxu0 0.0
    %98 = vmatprep.subr.mxu0 0.0
    %99 = vmatpush1.msra.mxu0 0.0
    %100 = vmatprep.subr.mxu0 0.0
    %101 = vmatpush1.msra.mxu0 0.0
    %102 = vmatprep.subr.mxu0 0.0
    %103 = vmatpush1.msra.mxu0 0.0
    %104 = vmatprep.subr.mxu0 0.0
    %105 = vmatpush1.msra.mxu0 0.0
    %106 = vmatprep.subr.mxu0 0.0
    %107 = vmatpush1.msra.mxu0 0.0
    %108 = vmatprep.subr.mxu0 0.0
    %109 = vmatpush1.msra.mxu0 0.0
    %110 = vmatprep.subr.mxu0 0.0
    %111 = vmatpush1.msra.mxu0 0.0
    %112 = vmatprep.subr.mxu0 0.0
    %113 = vmatpush1.msra.mxu0 0.0
    %114 = vmatprep.subr.mxu0 0.0
    %115 = vmatpush1.msra.mxu0 0.0
    %116 = vmatprep.subr.mxu0 0.0
    %117 = vmatpush1.msra.mxu0 0.0
    %118 = vmatprep.subr.mxu0 0.0
    %119 = vmatpush1.msra.mxu0 0.0
    %120 = vmatprep.subr.mxu0 0.0
    %121 = vmatpush1.msra.mxu0 0.0
    %122 = vmatprep.mubr.f32.mxu0 0.0
    %123 = vmatmul.mubr.f32.gmra.mrb[0].mxu0 %v56
    %v124 = vpop.f32.mrb[0].mxu0
    %v125 = vadd.f32 0.0, %v124
    %v126 = vpop.f32.mrb[0].mxu0
    %v127 = vadd.f32 0.0, %v126
    %128 = vdwg.mxu0
    %v129 = vadd.f32 %v52, %v125
    %v130 = vadd.f32 %v53, %v127
    %v131 = vtanh.pop %v129
    %v132 = vtanh.pop %v130
    %v133 = vxor.u32 %v129, 2147483648
    %v134 = vxor.u32 %v130, 2147483648
    %v135 = vmul.f32 %v133, 1.442695
    %v136 = vpow.pop %v135
    %v137 = vmul.f32 %v134, 1.442695
    %v138 = vpow.pop %v137
    %v139 = vadd.f32 %v136, 1.0
    %v140 = vadd.f32 %v138, 1.0
    %v141 = vrcp.pop %v139
    %v142 = vmul.f32 1.0, %v141
    %v143 = vrcp.pop %v140
    %v144 = vmul.f32 1.0, %v143
    %v145 = vsel %vm50, %v131, %v142
    %v146 = vsel %vm51, %v132, %v144
    %v147 = vmul.f32 %v145, 0.0
    %v148 = vmul.f32 %v145, %v146
    %150 = vrot.lane.b32.xlu0 %v148, 64
    %v151 = vpop.permute.xlu0 %150
    %v153 = vadd.f32 %v147, %v151
    %v154 = vtanh.pop %v153
    %v155 = vmul.f32 %v146, %v154
    %v156 = vld [vmem:[%s0] sm:$0xc]
    %v157 = vld [vmem:[%s0 + $0x8] sm:$0xc]
    %159 = vrot.lane.b32.xlu0 %v155, 64
    %v160 = vpop.permute.xlu0 %159
    %v161 = vsel %vm54, %v160, 0
    %163 = vmatprep.subr.mxu0 %v19
    %164 = vmatpush1.msra.mxu0 %v18
    %165 = vmatprep.subr.mxu0 %v21
    %166 = vmatpush1.msra.mxu0 %v20
    %167 = vmatprep.subr.mxu0 %v23
    %168 = vmatpush1.msra.mxu0 %v22
    %169 = vmatprep.subr.mxu0 %v25
    %170 = vmatpush1.msra.mxu0 %v24
    %171 = vmatprep.subr.mxu0 %v27
    %172 = vmatpush1.msra.mxu0 %v26
    %173 = vmatprep.subr.mxu0 %v29
    %174 = vmatpush1.msra.mxu0 %v28
    %175 = vmatprep.subr.mxu0 %v31
    %176 = vmatpush1.msra.mxu0 %v30
    %177 = vmatprep.subr.mxu0 %v33
    %178 = vmatpush1.msra.mxu0 %v32
    %179 = vmatprep.subr.mxu0 0.0
    %180 = vmatpush1.msra.mxu0 0.0
    %181 = vmatprep.subr.mxu0 0.0
    %182 = vmatpush1.msra.mxu0 0.0
    %183 = vmatprep.subr.mxu0 0.0
    %184 = vmatpush1.msra.mxu0 0.0
    %185 = vmatprep.subr.mxu0 0.0
    %186 = vmatpush1.msra.mxu0 0.0
    %187 = vmatprep.subr.mxu0 0.0
    %188 = vmatpush1.msra.mxu0 0.0
    %189 = vmatprep.subr.mxu0 0.0
    %190 = vmatpush1.msra.mxu0 0.0
    %191 = vmatprep.subr.mxu0 0.0
    %192 = vmatpush1.msra.mxu0 0.0
    %193 = vmatprep.subr.mxu0 0.0
    %194 = vmatpush1.msra.mxu0 0.0
    %195 = vmatprep.subr.mxu0 0.0
    %196 = vmatpush1.msra.mxu0 0.0
    %197 = vmatprep.subr.mxu0 0.0
    %198 = vmatpush1.msra.mxu0 0.0
    %199 = vmatprep.subr.mxu0 0.0
    %200 = vmatpush1.msra.mxu0 0.0
    %201 = vmatprep.subr.mxu0 0.0
    %202 = vmatpush1.msra.mxu0 0.0
    %203 = vmatprep.subr.mxu0 0.0
    %204 = vmatpush1.msra.mxu0 0.0
    %205 = vmatprep.subr.mxu0 0.0
    %206 = vmatpush1.msra.mxu0 0.0
    %207 = vmatprep.subr.mxu0 0.0
    %208 = vmatpush1.msra.mxu0 0.0
    %209 = vmatprep.subr.mxu0 0.0
    %210 = vmatpush1.msra.mxu0 0.0
    %211 = vmatprep.subr.mxu0 0.0
    %212 = vmatpush1.msra.mxu0 0.0
    %213 = vmatprep.subr.mxu0 0.0
    %214 = vmatpush1.msra.mxu0 0.0
    %215 = vmatprep.subr.mxu0 0.0
    %216 = vmatpush1.msra.mxu0 0.0
    %217 = vmatprep.subr.mxu0 0.0
    %218 = vmatpush1.msra.mxu0 0.0
    %219 = vmatprep.subr.mxu0 0.0
    %220 = vmatpush1.msra.mxu0 0.0
    %221 = vmatprep.subr.mxu0 0.0
    %222 = vmatpush1.msra.mxu0 0.0
    %223 = vmatprep.subr.mxu0 0.0
    %224 = vmatpush1.msra.mxu0 0.0
    %225 = vmatprep.subr.mxu0 0.0
    %226 = vmatpush1.msra.mxu0 0.0
    %227 = vmatprep.mubr.f32.mxu0 0.0
    %228 = vmatmul.mubr.f32.gmra.mrb[0].mxu0 %v161
    %v229 = vpop.f32.mrb[0].mxu0
    %v230 = vadd.f32 0.0, %v229
    %v231 = vpop.f32.mrb[0].mxu0
    %v232 = vadd.f32 0.0, %v231
    %233 = vdwg.mxu0
    %v236 = vrot.slane %v230, 6
    %v237 = vrot.slane %v232, 6
    %v240 = vadd.f32 %v156, %v236
    %v241 = vadd.f32 %v157, %v237
    %v242 = vtanh.pop %v240
    %v243 = vtanh.pop %v241
    %v244 = vxor.u32 %v240, 2147483648
    %v245 = vxor.u32 %v241, 2147483648
    %v246 = vmul.f32 %v244, 1.442695
    %v247 = vpow.pop %v246
    %v248 = vmul.f32 %v245, 1.442695
    %v249 = vpow.pop %v248
    %v250 = vadd.f32 %v247, 1.0
    %v251 = vadd.f32 %v249, 1.0
    %v252 = vrcp.pop %v250
    %v253 = vmul.f32 1.0, %v252
    %v254 = vrcp.pop %v251
    %v255 = vmul.f32 1.0, %v254
    %v256 = vsel %vm50, %v242, %v253
    %v257 = vsel %vm51, %v243, %v255
    %v259 = vrot.slane %v153, 6
    %v261 = vmul.f32 %v256, %v259
    %v262 = vmul.f32 %v256, %v257
    %264 = vrot.lane.b32.xlu0 %v262, 64
    %v265 = vpop.permute.xlu0 %264
    %v267 = vadd.f32 %v261, %v265
    %v268 = vtanh.pop %v267
    %v269 = vmul.f32 %v257, %v268
    %v270 = vld [vmem:[%s0] sm:$0x30]
    %v271 = vld [vmem:[%s0 + $0x8] sm:$0x30]
    %v273 = vrot.slane %v269, 2
    %274 = vrot.lane.b32.xlu0 %v273, 64
    %v275 = vpop.permute.xlu0 %274
    %v276 = vsel %vm54, %v275, 0
    %278 = vmatprep.subr.mxu0 %v19
    %279 = vmatpush1.msra.mxu0 %v18
    %280 = vmatprep.subr.mxu0 %v21
    %281 = vmatpush1.msra.mxu0 %v20
    %282 = vmatprep.subr.mxu0 %v23
    %283 = vmatpush1.msra.mxu0 %v22
    %284 = vmatprep.subr.mxu0 %v25
    %285 = vmatpush1.msra.mxu0 %v24
    %286 = vmatprep.subr.mxu0 %v27
    %287 = vmatpush1.msra.mxu0 %v26
    %288 = vmatprep.subr.mxu0 %v29
    %289 = vmatpush1.msra.mxu0 %v28
    %290 = vmatprep.subr.mxu0 %v31
    %291 = vmatpush1.msra.mxu0 %v30
    %292 = vmatprep.subr.mxu0 %v33
    %293 = vmatpush1.msra.mxu0 %v32
    %294 = vmatprep.subr.mxu0 0.0
    %295 = vmatpush1.msra.mxu0 0.0
    %296 = vmatprep.subr.mxu0 0.0
    %297 = vmatpush1.msra.mxu0 0.0
    %298 = vmatprep.subr.mxu0 0.0
    %299 = vmatpush1.msra.mxu0 0.0
    %300 = vmatprep.subr.mxu0 0.0
    %301 = vmatpush1.msra.mxu0 0.0
    %302 = vmatprep.subr.mxu0 0.0
    %303 = vmatpush1.msra.mxu0 0.0
    %304 = vmatprep.subr.mxu0 0.0
    %305 = vmatpush1.msra.mxu0 0.0
    %306 = vmatprep.subr.mxu0 0.0
    %307 = vmatpush1.msra.mxu0 0.0
    %308 = vmatprep.subr.mxu0 0.0
    %309 = vmatpush1.msra.mxu0 0.0
    %310 = vmatprep.subr.mxu0 0.0
    %311 = vmatpush1.msra.mxu0 0.0
    %312 = vmatprep.subr.mxu0 0.0
    %313 = vmatpush1.msra.mxu0 0.0
    %314 = vmatprep.subr.mxu0 0.0
    %315 = vmatpush1.msra.mxu0 0.0
    %316 = vmatprep.subr.mxu0 0.0
    %317 = vmatpush1.msra.mxu0 0.0
    %318 = vmatprep.subr.mxu0 0.0
    %319 = vmatpush1.msra.mxu0 0.0
    %320 = vmatprep.subr.mxu0 0.0
    %321 = vmatpush1.msra.mxu0 0.0
    %322 = vmatprep.subr.mxu0 0.0
    %323 = vmatpush1.msra.mxu0 0.0
    %324 = vmatprep.subr.mxu0 0.0
    %325 = vmatpush1.msra.mxu0 0.0
    %326 = vmatprep.subr.mxu0 0.0
    %327 = vmatpush1.msra.mxu0 0.0
    %328 = vmatprep.subr.mxu0 0.0
    %329 = vmatpush1.msra.mxu0 0.0
    %330 = vmatprep.subr.mxu0 0.0
    %331 = vmatpush1.msra.mxu0 0.0
    %332 = vmatprep.subr.mxu0 0.0
    %333 = vmatpush1.msra.mxu0 0.0
    %334 = vmatprep.subr.mxu0 0.0
    %335 = vmatpush1.msra.mxu0 0.0
    %336 = vmatprep.subr.mxu0 0.0
    %337 = vmatpush1.msra.mxu0 0.0
    %338 = vmatprep.subr.mxu0 0.0
    %339 = vmatpush1.msra.mxu0 0.0
    %340 = vmatprep.subr.mxu0 0.0
    %341 = vmatpush1.msra.mxu0 0.0
    %342 = vmatprep.mubr.f32.mxu0 0.0
    %343 = vmatmul.mubr.f32.gmra.mrb[0].mxu0 %v276
    %v344 = vpop.f32.mrb[0].mxu0
    %v345 = vadd.f32 0.0, %v344
    %v346 = vpop.f32.mrb[0].mxu0
    %v347 = vadd.f32 0.0, %v346
    %348 = vdwg.mxu0
    %v351 = vrot.slane %v345, 4
    %v352 = vrot.slane %v347, 4
    %v355 = vadd.f32 %v270, %v351
    %v356 = vadd.f32 %v271, %v352
    %v357 = vtanh.pop %v355
    %v358 = vtanh.pop %v356
    %v359 = vxor.u32 %v355, 2147483648
    %v360 = vxor.u32 %v356, 2147483648
    %v361 = vmul.f32 %v359, 1.442695
    %v362 = vpow.pop %v361
    %v363 = vmul.f32 %v360, 1.442695
    %v364 = vpow.pop %v363
    %v365 = vadd.f32 %v362, 1.0
    %v366 = vadd.f32 %v364, 1.0
    %v367 = vrcp.pop %v365
    %v368 = vmul.f32 1.0, %v367
    %v369 = vrcp.pop %v366
    %v370 = vmul.f32 1.0, %v369
    %v371 = vsel %vm50, %v357, %v368
    %v372 = vsel %vm51, %v358, %v370
    %v374 = vrot.slane %v267, 6
    %v376 = vmul.f32 %v371, %v374
    %v377 = vmul.f32 %v371, %v372
    %379 = vrot.lane.b32.xlu0 %v377, 64
    %v380 = vpop.permute.xlu0 %379
    %v382 = vadd.f32 %v376, %v380
    %v383 = vtanh.pop %v382
    %v384 = vmul.f32 %v372, %v383
    %v385 = vld [vmem:[%s0] sm:$0xc0]
    %v386 = vld [vmem:[%s0 + $0x8] sm:$0xc0]
    %v388 = vrot.slane %v384, 4
    %389 = vrot.lane.b32.xlu0 %v388, 64
    %v390 = vpop.permute.xlu0 %389
    %v391 = vsel %vm54, %v390, 0
    %393 = vmatprep.subr.mxu0 %v19
    %394 = vmatpush1.msra.mxu0 %v18
    %395 = vmatprep.subr.mxu0 %v21
    %396 = vmatpush1.msra.mxu0 %v20
    %397 = vmatprep.subr.mxu0 %v23
    %398 = vmatpush1.msra.mxu0 %v22
    %399 = vmatprep.subr.mxu0 %v25
    %400 = vmatpush1.msra.mxu0 %v24
    %401 = vmatprep.subr.mxu0 %v27
    %402 = vmatpush1.msra.mxu0 %v26
    %403 = vmatprep.subr.mxu0 %v29
    %404 = vmatpush1.msra.mxu0 %v28
    %405 = vmatprep.subr.mxu0 %v31
    %406 = vmatpush1.msra.mxu0 %v30
    %407 = vmatprep.subr.mxu0 %v33
    %408 = vmatpush1.msra.mxu0 %v32
    %409 = vmatprep.subr.mxu0 0.0
    %410 = vmatpush1.msra.mxu0 0.0
    %411 = vmatprep.subr.mxu0 0.0
    %412 = vmatpush1.msra.mxu0 0.0
    %413 = vmatprep.subr.mxu0 0.0
    %414 = vmatpush1.msra.mxu0 0.0
    %415 = vmatprep.subr.mxu0 0.0
    %416 = vmatpush1.msra.mxu0 0.0
    %417 = vmatprep.subr.mxu0 0.0
    %418 = vmatpush1.msra.mxu0 0.0
    %419 = vmatprep.subr.mxu0 0.0
    %420 = vmatpush1.msra.mxu0 0.0
    %421 = vmatprep.subr.mxu0 0.0
    %422 = vmatpush1.msra.mxu0 0.0
    %423 = vmatprep.subr.mxu0 0.0
    %424 = vmatpush1.msra.mxu0 0.0
    %425 = vmatprep.subr.mxu0 0.0
    %426 = vmatpush1.msra.mxu0 0.0
    %427 = vmatprep.subr.mxu0 0.0
    %428 = vmatpush1.msra.mxu0 0.0
    %429 = vmatprep.subr.mxu0 0.0
    %430 = vmatpush1.msra.mxu0 0.0
    %431 = vmatprep.subr.mxu0 0.0
    %432 = vmatpush1.msra.mxu0 0.0
    %433 = vmatprep.subr.mxu0 0.0
    %434 = vmatpush1.msra.mxu0 0.0
    %435 = vmatprep.subr.mxu0 0.0
    %436 = vmatpush1.msra.mxu0 0.0
    %437 = vmatprep.subr.mxu0 0.0
    %438 = vmatpush1.msra.mxu0 0.0
    %439 = vmatprep.subr.mxu0 0.0
    %440 = vmatpush1.msra.mxu0 0.0
    %441 = vmatprep.subr.mxu0 0.0
    %442 = vmatpush1.msra.mxu0 0.0
    %443 = vmatprep.subr.mxu0 0.0
    %444 = vmatpush1.msra.mxu0 0.0
    %445 = vmatprep.subr.mxu0 0.0
    %446 = vmatpush1.msra.mxu0 0.0
    %447 = vmatprep.subr.mxu0 0.0
    %448 = vmatpush1.msra.mxu0 0.0
    %449 = vmatprep.subr.mxu0 0.0
    %450 = vmatpush1.msra.mxu0 0.0
    %451 = vmatprep.subr.mxu0 0.0
    %452 = vmatpush1.msra.mxu0 0.0
    %453 = vmatprep.subr.mxu0 0.0
    %454 = vmatpush1.msra.mxu0 0.0
    %455 = vmatprep.subr.mxu0 0.0
    %456 = vmatpush1.msra.mxu0 0.0
    %457 = vmatprep.mubr.f32.mxu0 0.0
    %458 = vmatmul.mubr.f32.gmra.mrb[0].mxu0 %v391
    %v459 = vpop.f32.mrb[0].mxu0
    %v460 = vadd.f32 0.0, %v459
    %v461 = vpop.f32.mrb[0].mxu0
    %v462 = vadd.f32 0.0, %v461
    %463 = vdwg.mxu0
    %v466 = vrot.slane %v460, 2
    %v467 = vrot.slane %v462, 2
    %v470 = vadd.f32 %v385, %v466
    %v471 = vadd.f32 %v386, %v467
    %v472 = vtanh.pop %v470
    %v473 = vtanh.pop %v471
    %v474 = vxor.u32 %v470, 2147483648
    %v475 = vxor.u32 %v471, 2147483648
    %v476 = vmul.f32 %v474, 1.442695
    %v477 = vpow.pop %v476
    %v478 = vmul.f32 %v475, 1.442695
    %v479 = vpow.pop %v478
    %v480 = vadd.f32 %v477, 1.0
    %v481 = vadd.f32 %v479, 1.0
    %v482 = vrcp.pop %v480
    %v483 = vmul.f32 1.0, %v482
    %v484 = vrcp.pop %v481
    %v485 = vmul.f32 1.0, %v484
    %v486 = vsel %vm50, %v472, %v483
    %v487 = vsel %vm51, %v473, %v485
    %v489 = vrot.slane %v382, 6
    %v491 = vmul.f32 %v486, %v489
    %v492 = vmul.f32 %v486, %v487
    %494 = vrot.lane.b32.xlu0 %v492, 64
    %v495 = vpop.permute.xlu0 %494
    %v497 = vadd.f32 %v491, %v495
    %v498 = vtanh.pop %v497
    %v499 = vmul.f32 %v487, %v498
    %v500 = vld [vmem:[%s0 + $0x10] sm:$0x3]
    %v501 = vld [vmem:[%s0 + $0x18] sm:$0x3]
    %v503 = vrot.slane %v499, 6
    %504 = vrot.lane.b32.xlu0 %v503, 64
    %v505 = vpop.permute.xlu0 %504
    %v506 = vsel %vm54, %v505, 0
    %508 = vmatprep.subr.mxu0 %v19
    %509 = vmatpush1.msra.mxu0 %v18
    %510 = vmatprep.subr.mxu0 %v21
    %511 = vmatpush1.msra.mxu0 %v20
    %512 = vmatprep.subr.mxu0 %v23
    %513 = vmatpush1.msra.mxu0 %v22
    %514 = vmatprep.subr.mxu0 %v25
    %515 = vmatpush1.msra.mxu0 %v24
    %516 = vmatprep.subr.mxu0 %v27
    %517 = vmatpush1.msra.mxu0 %v26
    %518 = vmatprep.subr.mxu0 %v29
    %519 = vmatpush1.msra.mxu0 %v28
    %520 = vmatprep.subr.mxu0 %v31
    %521 = vmatpush1.msra.mxu0 %v30
    %522 = vmatprep.subr.mxu0 %v33
    %523 = vmatpush1.msra.mxu0 %v32
    %524 = vmatprep.subr.mxu0 0.0
    %525 = vmatpush1.msra.mxu0 0.0
    %526 = vmatprep.subr.mxu0 0.0
    %527 = vmatpush1.msra.mxu0 0.0
    %528 = vmatprep.subr.mxu0 0.0
    %529 = vmatpush1.msra.mxu0 0.0
    %530 = vmatprep.subr.mxu0 0.0
    %531 = vmatpush1.msra.mxu0 0.0
    %532 = vmatprep.subr.mxu0 0.0
    %533 = vmatpush1.msra.mxu0 0.0
    %534 = vmatprep.subr.mxu0 0.0
    %535 = vmatpush1.msra.mxu0 0.0
    %536 = vmatprep.subr.mxu0 0.0
    %537 = vmatpush1.msra.mxu0 0.0
    %538 = vmatprep.subr.mxu0 0.0
    %539 = vmatpush1.msra.mxu0 0.0
    %540 = vmatprep.subr.mxu0 0.0
    %541 = vmatpush1.msra.mxu0 0.0
    %542 = vmatprep.subr.mxu0 0.0
    %543 = vmatpush1.msra.mxu0 0.0
    %544 = vmatprep.subr.mxu0 0.0
    %545 = vmatpush1.msra.mxu0 0.0
    %546 = vmatprep.subr.mxu0 0.0
    %547 = vmatpush1.msra.mxu0 0.0
    %548 = vmatprep.subr.mxu0 0.0
    %549 = vmatpush1.msra.mxu0 0.0
    %550 = vmatprep.subr.mxu0 0.0
    %551 = vmatpush1.msra.mxu0 0.0
    %552 = vmatprep.subr.mxu0 0.0
    %553 = vmatpush1.msra.mxu0 0.0
    %554 = vmatprep.subr.mxu0 0.0
    %555 = vmatpush1.msra.mxu0 0.0
    %556 = vmatprep.subr.mxu0 0.0
    %557 = vmatpush1.msra.mxu0 0.0
    %558 = vmatprep.subr.mxu0 0.0
    %559 = vmatpush1.msra.mxu0 0.0
    %560 = vmatprep.subr.mxu0 0.0
    %561 = vmatpush1.msra.mxu0 0.0
    %562 = vmatprep.subr.mxu0 0.0
    %563 = vmatpush1.msra.mxu0 0.0
    %564 = vmatprep.subr.mxu0 0.0
    %565 = vmatpush1.msra.mxu0 0.0
    %566 = vmatprep.subr.mxu0 0.0
    %567 = vmatpush1.msra.mxu0 0.0
    %568 = vmatprep.subr.mxu0 0.0
    %569 = vmatpush1.msra.mxu0 0.0
    %570 = vmatprep.subr.mxu0 0.0
    %571 = vmatpush1.msra.mxu0 0.0
    %572 = vmatprep.mubr.f32.mxu0 0.0
    %573 = vmatmul.mubr.f32.gmra.mrb[0].mxu0 %v506
    %v574 = vpop.f32.mrb[0].mxu0
    %v575 = vadd.f32 0.0, %v574
    %v576 = vpop.f32.mrb[0].mxu0
    %v577 = vadd.f32 0.0, %v576
    %578 = vdwg.mxu0
    %v579 = vadd.f32 %v500, %v575
    %v580 = vadd.f32 %v501, %v577
    %v581 = vtanh.pop %v579
    %v582 = vtanh.pop %v580
    %v583 = vxor.u32 %v579, 2147483648
    %v584 = vxor.u32 %v580, 2147483648
    %v585 = vmul.f32 %v583, 1.442695
    %v586 = vpow.pop %v585
    %v587 = vmul.f32 %v584, 1.442695
    %v588 = vpow.pop %v587
    %v589 = vadd.f32 %v586, 1.0
    %v590 = vadd.f32 %v588, 1.0
    %v591 = vrcp.pop %v589
    %v592 = vmul.f32 1.0, %v591
    %v593 = vrcp.pop %v590
    %v594 = vmul.f32 1.0, %v593
    %v595 = vsel %vm50, %v581, %v592
    %v596 = vsel %vm51, %v582, %v594
    %v598 = vrot.slane %v497, 6
    %v600 = vmul.f32 %v595, %v598
    %v601 = vmul.f32 %v595, %v596
    %603 = vrot.lane.b32.xlu0 %v601, 64
    %v604 = vpop.permute.xlu0 %603
    %v606 = vadd.f32 %v600, %v604
    %v607 = vtanh.pop %v606
    %v608 = vmul.f32 %v596, %v607
    %v609 = vld [vmem:[%s0 + $0x10] sm:$0xc]
    %v610 = vld [vmem:[%s0 + $0x18] sm:$0xc]
    %612 = vrot.lane.b32.xlu0 %v608, 64
    %v613 = vpop.permute.xlu0 %612
    %v614 = vsel %vm54, %v613, 0
    %616 = vmatprep.subr.mxu0 %v19
    %617 = vmatpush1.msra.mxu0 %v18
    %618 = vmatprep.subr.mxu0 %v21
    %619 = vmatpush1.msra.mxu0 %v20
    %620 = vmatprep.subr.mxu0 %v23
    %621 = vmatpush1.msra.mxu0 %v22
    %622 = vmatprep.subr.mxu0 %v25
    %623 = vmatpush1.msra.mxu0 %v24
    %624 = vmatprep.subr.mxu0 %v27
    %625 = vmatpush1.msra.mxu0 %v26
    %626 = vmatprep.subr.mxu0 %v29
    %627 = vmatpush1.msra.mxu0 %v28
    %628 = vmatprep.subr.mxu0 %v31
    %629 = vmatpush1.msra.mxu0 %v30
    %630 = vmatprep.subr.mxu0 %v33
    %631 = vmatpush1.msra.mxu0 %v32
    %632 = vmatprep.subr.mxu0 0.0
    %633 = vmatpush1.msra.mxu0 0.0
    %634 = vmatprep.subr.mxu0 0.0
    %635 = vmatpush1.msra.mxu0 0.0
    %636 = vmatprep.subr.mxu0 0.0
    %637 = vmatpush1.msra.mxu0 0.0
    %638 = vmatprep.subr.mxu0 0.0
    %639 = vmatpush1.msra.mxu0 0.0
    %640 = vmatprep.subr.mxu0 0.0
    %641 = vmatpush1.msra.mxu0 0.0
    %642 = vmatprep.subr.mxu0 0.0
    %643 = vmatpush1.msra.mxu0 0.0
    %644 = vmatprep.subr.mxu0 0.0
    %645 = vmatpush1.msra.mxu0 0.0
    %646 = vmatprep.subr.mxu0 0.0
    %647 = vmatpush1.msra.mxu0 0.0
    %648 = vmatprep.subr.mxu0 0.0
    %649 = vmatpush1.msra.mxu0 0.0
    %650 = vmatprep.subr.mxu0 0.0
    %651 = vmatpush1.msra.mxu0 0.0
    %652 = vmatprep.subr.mxu0 0.0
    %653 = vmatpush1.msra.mxu0 0.0
    %654 = vmatprep.subr.mxu0 0.0
    %655 = vmatpush1.msra.mxu0 0.0
    %656 = vmatprep.subr.mxu0 0.0
    %657 = vmatpush1.msra.mxu0 0.0
    %658 = vmatprep.subr.mxu0 0.0
    %659 = vmatpush1.msra.mxu0 0.0
    %660 = vmatprep.subr.mxu0 0.0
    %661 = vmatpush1.msra.mxu0 0.0
    %662 = vmatprep.subr.mxu0 0.0
    %663 = vmatpush1.msra.mxu0 0.0
    %664 = vmatprep.subr.mxu0 0.0
    %665 = vmatpush1.msra.mxu0 0.0
    %666 = vmatprep.subr.mxu0 0.0
    %667 = vmatpush1.msra.mxu0 0.0
    %668 = vmatprep.subr.mxu0 0.0
    %669 = vmatpush1.msra.mxu0 0.0
    %670 = vmatprep.subr.mxu0 0.0
    %671 = vmatpush1.msra.mxu0 0.0
    %672 = vmatprep.subr.mxu0 0.0
    %673 = vmatpush1.msra.mxu0 0.0
    %674 = vmatprep.subr.mxu0 0.0
    %675 = vmatpush1.msra.mxu0 0.0
    %676 = vmatprep.subr.mxu0 0.0
    %677 = vmatpush1.msra.mxu0 0.0
    %678 = vmatprep.subr.mxu0 0.0
    %679 = vmatpush1.msra.mxu0 0.0
    %680 = vmatprep.mubr.f32.mxu0 0.0
    %681 = vmatmul.mubr.f32.gmra.mrb[0].mxu0 %v614
    %v682 = vpop.f32.mrb[0].mxu0
    %v683 = vadd.f32 0.0, %v682
    %v684 = vpop.f32.mrb[0].mxu0
    %v685 = vadd.f32 0.0, %v684
    %686 = vdwg.mxu0
    %v689 = vrot.slane %v683, 6
    %v690 = vrot.slane %v685, 6
    %v693 = vadd.f32 %v609, %v689
    %v694 = vadd.f32 %v610, %v690
    %v695 = vtanh.pop %v693
    %v696 = vtanh.pop %v694
    %v697 = vxor.u32 %v693, 2147483648
    %v698 = vxor.u32 %v694, 2147483648
    %v699 = vmul.f32 %v697, 1.442695
    %v700 = vpow.pop %v699
    %v701 = vmul.f32 %v698, 1.442695
    %v702 = vpow.pop %v701
    %v703 = vadd.f32 %v700, 1.0
    %v704 = vadd.f32 %v702, 1.0
    %v705 = vrcp.pop %v703
    %v706 = vmul.f32 1.0, %v705
    %v707 = vrcp.pop %v704
    %v708 = vmul.f32 1.0, %v707
    %v709 = vsel %vm50, %v695, %v706
    %v710 = vsel %vm51, %v696, %v708
    %v712 = vrot.slane %v606, 6
    %v714 = vmul.f32 %v709, %v712
    %v715 = vmul.f32 %v709, %v710
    %717 = vrot.lane.b32.xlu0 %v715, 64
    %v718 = vpop.permute.xlu0 %717
    %v720 = vadd.f32 %v714, %v718
    %v721 = vtanh.pop %v720
    %v722 = vmul.f32 %v710, %v721
    %v723 = vld [vmem:[%s0 + $0x10] sm:$0x30]
    %v724 = vld [vmem:[%s0 + $0x18] sm:$0x30]
    %v726 = vrot.slane %v722, 2
    %727 = vrot.lane.b32.xlu0 %v726, 64
    %v728 = vpop.permute.xlu0 %727
    %v729 = vsel %vm54, %v728, 0
    %731 = vmatprep.subr.mxu0 %v19
    %732 = vmatpush1.msra.mxu0 %v18
    %733 = vmatprep.subr.mxu0 %v21
    %734 = vmatpush1.msra.mxu0 %v20
    %735 = vmatprep.subr.mxu0 %v23
    %736 = vmatpush1.msra.mxu0 %v22
    %737 = vmatprep.subr.mxu0 %v25
    %738 = vmatpush1.msra.mxu0 %v24
    %739 = vmatprep.subr.mxu0 %v27
    %740 = vmatpush1.msra.mxu0 %v26
    %741 = vmatprep.subr.mxu0 %v29
    %742 = vmatpush1.msra.mxu0 %v28
    %743 = vmatprep.subr.mxu0 %v31
    %744 = vmatpush1.msra.mxu0 %v30
    %745 = vmatprep.subr.mxu0 %v33
    %746 = vmatpush1.msra.mxu0 %v32
    %747 = vmatprep.subr.mxu0 0.0
    %748 = vmatpush1.msra.mxu0 0.0
    %749 = vmatprep.subr.mxu0 0.0
    %750 = vmatpush1.msra.mxu0 0.0
    %751 = vmatprep.subr.mxu0 0.0
    %752 = vmatpush1.msra.mxu0 0.0
    %753 = vmatprep.subr.mxu0 0.0
    %754 = vmatpush1.msra.mxu0 0.0
    %755 = vmatprep.subr.mxu0 0.0
    %756 = vmatpush1.msra.mxu0 0.0
    %757 = vmatprep.subr.mxu0 0.0
    %758 = vmatpush1.msra.mxu0 0.0
    %759 = vmatprep.subr.mxu0 0.0
    %760 = vmatpush1.msra.mxu0 0.0
    %761 = vmatprep.subr.mxu0 0.0
    %762 = vmatpush1.msra.mxu0 0.0
    %763 = vmatprep.subr.mxu0 0.0
    %764 = vmatpush1.msra.mxu0 0.0
    %765 = vmatprep.subr.mxu0 0.0
    %766 = vmatpush1.msra.mxu0 0.0
    %767 = vmatprep.subr.mxu0 0.0
    %768 = vmatpush1.msra.mxu0 0.0
    %769 = vmatprep.subr.mxu0 0.0
    %770 = vmatpush1.msra.mxu0 0.0
    %771 = vmatprep.subr.mxu0 0.0
    %772 = vmatpush1.msra.mxu0 0.0
    %773 = vmatprep.subr.mxu0 0.0
    %774 = vmatpush1.msra.mxu0 0.0
    %775 = vmatprep.subr.mxu0 0.0
    %776 = vmatpush1.msra.mxu0 0.0
    %777 = vmatprep.subr.mxu0 0.0
    %778 = vmatpush1.msra.mxu0 0.0
    %779 = vmatprep.subr.mxu0 0.0
    %780 = vmatpush1.msra.mxu0 0.0
    %781 = vmatprep.subr.mxu0 0.0
    %782 = vmatpush1.msra.mxu0 0.0
    %783 = vmatprep.subr.mxu0 0.0
    %784 = vmatpush1.msra.mxu0 0.0
    %785 = vmatprep.subr.mxu0 0.0
    %786 = vmatpush1.msra.mxu0 0.0
    %787 = vmatprep.subr.mxu0 0.0
    %788 = vmatpush1.msra.mxu0 0.0
    %789 = vmatprep.subr.mxu0 0.0
    %790 = vmatpush1.msra.mxu0 0.0
    %791 = vmatprep.subr.mxu0 0.0
    %792 = vmatpush1.msra.mxu0 0.0
    %793 = vmatprep.subr.mxu0 0.0
    %794 = vmatpush1.msra.mxu0 0.0
    %795 = vmatprep.mubr.f32.mxu0 0.0
    %796 = vmatmul.mubr.f32.gmra.mrb[0].mxu0 %v729
    %v797 = vpop.f32.mrb[0].mxu0
    %v798 = vadd.f32 0.0, %v797
    %v799 = vpop.f32.mrb[0].mxu0
    %v800 = vadd.f32 0.0, %v799
    %801 = vdwg.mxu0
    %v804 = vrot.slane %v798, 4
    %v805 = vrot.slane %v800, 4
    %v808 = vadd.f32 %v723, %v804
    %v809 = vadd.f32 %v724, %v805
    %v810 = vtanh.pop %v808
    %v811 = vtanh.pop %v809
    %v812 = vxor.u32 %v808, 2147483648
    %v813 = vxor.u32 %v809, 2147483648
    %v814 = vmul.f32 %v812, 1.442695
    %v815 = vpow.pop %v814
    %v816 = vmul.f32 %v813, 1.442695
    %v817 = vpow.pop %v816
    %v818 = vadd.f32 %v815, 1.0
    %v819 = vadd.f32 %v817, 1.0
    %v820 = vrcp.pop %v818
    %v821 = vmul.f32 1.0, %v820
    %v822 = vrcp.pop %v819
    %v823 = vmul.f32 1.0, %v822
    %v824 = vsel %vm50, %v810, %v821
    %v825 = vsel %vm51, %v811, %v823
    %v827 = vrot.slane %v720, 6
    %v829 = vmul.f32 %v824, %v827
    %v830 = vmul.f32 %v824, %v825
    %832 = vrot.lane.b32.xlu0 %v830, 64
    %v833 = vpop.permute.xlu0 %832
    %v835 = vadd.f32 %v829, %v833
    %v836 = vtanh.pop %v835
    %v837 = vmul.f32 %v825, %v836
    %v838 = vld [vmem:[%s0 + $0x10] sm:$0xc0]
    %v839 = vld [vmem:[%s0 + $0x18] sm:$0xc0]
    %v841 = vrot.slane %v837, 4
    %842 = vrot.lane.b32.xlu0 %v841, 64
    %v843 = vpop.permute.xlu0 %842
    %v844 = vsel %vm54, %v843, 0
    %846 = vmatprep.subr.mxu0 %v19
    %847 = vmatpush1.msra.mxu0 %v18
    %848 = vmatprep.subr.mxu0 %v21
    %849 = vmatpush1.msra.mxu0 %v20
    %850 = vmatprep.subr.mxu0 %v23
    %851 = vmatpush1.msra.mxu0 %v22
    %852 = vmatprep.subr.mxu0 %v25
    %853 = vmatpush1.msra.mxu0 %v24
    %854 = vmatprep.subr.mxu0 %v27
    %855 = vmatpush1.msra.mxu0 %v26
    %856 = vmatprep.subr.mxu0 %v29
    %857 = vmatpush1.msra.mxu0 %v28
    %858 = vmatprep.subr.mxu0 %v31
    %859 = vmatpush1.msra.mxu0 %v30
    %860 = vmatprep.subr.mxu0 %v33
    %861 = vmatpush1.msra.mxu0 %v32
    %862 = vmatprep.subr.mxu0 0.0
    %863 = vmatpush1.msra.mxu0 0.0
    %864 = vmatprep.subr.mxu0 0.0
    %865 = vmatpush1.msra.mxu0 0.0
    %866 = vmatprep.subr.mxu0 0.0
    %867 = vmatpush1.msra.mxu0 0.0
    %868 = vmatprep.subr.mxu0 0.0
    %869 = vmatpush1.msra.mxu0 0.0
    %870 = vmatprep.subr.mxu0 0.0
    %871 = vmatpush1.msra.mxu0 0.0
    %872 = vmatprep.subr.mxu0 0.0
    %873 = vmatpush1.msra.mxu0 0.0
    %874 = vmatprep.subr.mxu0 0.0
    %875 = vmatpush1.msra.mxu0 0.0
    %876 = vmatprep.subr.mxu0 0.0
    %877 = vmatpush1.msra.mxu0 0.0
    %878 = vmatprep.subr.mxu0 0.0
    %879 = vmatpush1.msra.mxu0 0.0
    %880 = vmatprep.subr.mxu0 0.0
    %881 = vmatpush1.msra.mxu0 0.0
    %882 = vmatprep.subr.mxu0 0.0
    %883 = vmatpush1.msra.mxu0 0.0
    %884 = vmatprep.subr.mxu0 0.0
    %885 = vmatpush1.msra.mxu0 0.0
    %886 = vmatprep.subr.mxu0 0.0
    %887 = vmatpush1.msra.mxu0 0.0
    %888 = vmatprep.subr.mxu0 0.0
    %889 = vmatpush1.msra.mxu0 0.0
    %890 = vmatprep.subr.mxu0 0.0
    %891 = vmatpush1.msra.mxu0 0.0
    %892 = vmatprep.subr.mxu0 0.0
    %893 = vmatpush1.msra.mxu0 0.0
    %894 = vmatprep.subr.mxu0 0.0
    %895 = vmatpush1.msra.mxu0 0.0
    %896 = vmatprep.subr.mxu0 0.0
    %897 = vmatpush1.msra.mxu0 0.0
    %898 = vmatprep.subr.mxu0 0.0
    %899 = vmatpush1.msra.mxu0 0.0
    %900 = vmatprep.subr.mxu0 0.0
    %901 = vmatpush1.msra.mxu0 0.0
    %902 = vmatprep.subr.mxu0 0.0
    %903 = vmatpush1.msra.mxu0 0.0
    %904 = vmatprep.subr.mxu0 0.0
    %905 = vmatpush1.msra.mxu0 0.0
    %906 = vmatprep.subr.mxu0 0.0
    %907 = vmatpush1.msra.mxu0 0.0
    %908 = vmatprep.subr.mxu0 0.0
    %909 = vmatpush1.msra.mxu0 0.0
    %910 = vmatprep.mubr.f32.mxu0 0.0
    %911 = vmatmul.mubr.f32.gmra.mrb[0].mxu0 %v844
    %v912 = vpop.f32.mrb[0].mxu0
    %v913 = vadd.f32 0.0, %v912
    %v914 = vpop.f32.mrb[0].mxu0
    %v915 = vadd.f32 0.0, %v914
    %916 = vdwg.mxu0
    %v919 = vrot.slane %v913, 2
    %v920 = vrot.slane %v915, 2
    %v923 = vadd.f32 %v838, %v919
    %v924 = vadd.f32 %v839, %v920
    %v925 = vtanh.pop %v923
    %v926 = vtanh.pop %v924
    %v927 = vxor.u32 %v923, 2147483648
    %v928 = vxor.u32 %v924, 2147483648
    %v929 = vmul.f32 %v927, 1.442695
    %v930 = vpow.pop %v929
    %v931 = vmul.f32 %v928, 1.442695
    %v932 = vpow.pop %v931
    %v933 = vadd.f32 %v930, 1.0
    %v934 = vadd.f32 %v932, 1.0
    %v935 = vrcp.pop %v933
    %v936 = vmul.f32 1.0, %v935
    %v937 = vrcp.pop %v934
    %v938 = vmul.f32 1.0, %v937
    %v939 = vsel %vm50, %v925, %v936
    %v940 = vsel %vm51, %v926, %v938
    %v942 = vrot.slane %v835, 6
    %v944 = vmul.f32 %v939, %v942
    %v945 = vmul.f32 %v939, %v940
    %947 = vrot.lane.b32.xlu0 %v945, 64
    %v948 = vpop.permute.xlu0 %947
    %v950 = vadd.f32 %v944, %v948
    %v951 = vtanh.pop %v950
    %v952 = vmul.f32 %v940, %v951
    %v954 = vlaneseq
    %v955 = vshrl.u32 %v954, 7
    %v956 = vsub.s32 0, %v955
    %v957 = vrot.slane %v42, %v956
    %v960 = vrot.slane %v952, 6
    %961 = vrot.lane.b32.xlu0 %v960, 64
    %v962 = vpop.permute.xlu0 %961
    %v963 = vsel %vm54, %v962, 0
    %965 = vmatprep.subr.mxu0 0.0
    %966 = vmatpush1.msra.mxu0 %v34
    %967 = vmatprep.subr.mxu0 0.0
    %968 = vmatpush1.msra.mxu0 %v35
    %969 = vmatprep.subr.mxu0 0.0
    %970 = vmatpush1.msra.mxu0 %v36
    %971 = vmatprep.subr.mxu0 0.0
    %972 = vmatpush1.msra.mxu0 %v37
    %973 = vmatprep.subr.mxu0 0.0
    %974 = vmatpush1.msra.mxu0 %v38
    %975 = vmatprep.subr.mxu0 0.0
    %976 = vmatpush1.msra.mxu0 %v39
    %977 = vmatprep.subr.mxu0 0.0
    %978 = vmatpush1.msra.mxu0 %v40
    %979 = vmatprep.subr.mxu0 0.0
    %980 = vmatpush1.msra.mxu0 %v41
    %981 = vmatprep.subr.mxu0 0.0
    %982 = vmatpush1.msra.mxu0 0.0
    %983 = vmatprep.subr.mxu0 0.0
    %984 = vmatpush1.msra.mxu0 0.0
    %985 = vmatprep.subr.mxu0 0.0
    %986 = vmatpush1.msra.mxu0 0.0
    %987 = vmatprep.subr.mxu0 0.0
    %988 = vmatpush1.msra.mxu0 0.0
    %989 = vmatprep.subr.mxu0 0.0
    %990 = vmatpush1.msra.mxu0 0.0
    %991 = vmatprep.subr.mxu0 0.0
    %992 = vmatpush1.msra.mxu0 0.0
    %993 = vmatprep.subr.mxu0 0.0
    %994 = vmatpush1.msra.mxu0 0.0
    %995 = vmatprep.subr.mxu0 0.0
    %996 = vmatpush1.msra.mxu0 0.0
    %997 = vmatprep.subr.mxu0 0.0
    %998 = vmatpush1.msra.mxu0 0.0
    %999 = vmatprep.subr.mxu0 0.0
    %1000 = vmatpush1.msra.mxu0 0.0
    %1001 = vmatprep.subr.mxu0 0.0
    %1002 = vmatpush1.msra.mxu0 0.0
    %1003 = vmatprep.subr.mxu0 0.0
    %1004 = vmatpush1.msra.mxu0 0.0
    %1005 = vmatprep.subr.mxu0 0.0
    %1006 = vmatpush1.msra.mxu0 0.0
    %1007 = vmatprep.subr.mxu0 0.0
    %1008 = vmatpush1.msra.mxu0 0.0
    %1009 = vmatprep.subr.mxu0 0.0
    %1010 = vmatpush1.msra.mxu0 0.0
    %1011 = vmatprep.subr.mxu0 0.0
    %1012 = vmatpush1.msra.mxu0 0.0
    %1013 = vmatprep.subr.mxu0 0.0
    %1014 = vmatpush1.msra.mxu0 0.0
    %1015 = vmatprep.subr.mxu0 0.0
    %1016 = vmatpush1.msra.mxu0 0.0
    %1017 = vmatprep.subr.mxu0 0.0
    %1018 = vmatpush1.msra.mxu0 0.0
    %1019 = vmatprep.subr.mxu0 0.0
    %1020 = vmatpush1.msra.mxu0 0.0
    %1021 = vmatprep.subr.mxu0 0.0
    %1022 = vmatpush1.msra.mxu0 0.0
    %1023 = vmatprep.subr.mxu0 0.0
    %1024 = vmatpush1.msra.mxu0 0.0
    %1025 = vmatprep.subr.mxu0 0.0
    %1026 = vmatpush1.msra.mxu0 0.0
    %1027 = vmatprep.subr.mxu0 0.0
    %1028 = vmatpush1.msra.mxu0 0.0
    %1029 = vmatprep.mubr.f32.mxu0 0.0
    %1030 = vmatmul.mubr.f32.gmra.mrb[0].mxu0 %v963
    %v1031 = vpop.f32.mrb[0].mxu0
    %v1032 = vadd.f32 %v957, %v1031
    %v1033 = vpop.f32.mrb[0].mxu0
    %1034 = vdwg.mxu0
    %vm1035 = vcmask 9216
    %v1036 = vsel %vm1035, %v1032, -inf
    %1037 = vmax.xlane.f32.xlu0 %v1036
    %v1038 = vpop.xlane.xlu0 %1037
    %v1039 = vsub.f32 %v1032, %v1038
    %v1040 = vmul.f32 %v1039, 1.442695
    %v1041 = vpow.pop %v1040
    %v1042 = vsel %vm1035, %v1041, 0.0
    %1043 = vadd.xlane.f32.xlu0 %v1042
    %v1044 = vpop.xlane.xlu0 %1043
    %v1045 = vlog2.pop %v1044
    %v1046 = vmul.f32 %v1045, 0.6931472
    %v1047 = vadd.f32 %v1038, %v1046
    %v1048 = vsub.f32 %v1032, %v1047
    %1049 = vst.msk [vmem:[#allocation2] sm:$0x3] %vm1035, %v1048
    // Predicated region
    $region18: #{mymodel_forward.1} parent=1 // pred_check
      _
    $region19: #{mymodel_forward.1} parent=1 // pred_check_branch
      %1051 = sbr.rel (0) target = $region21
    $region20: #{mymodel_forward.1} parent=1 // pred_region
      %s1053 = ssub.s32 32, 32
      %1054 = vsyncadd [#allocation3], %s1053
      %s1056 = sshll.u32 [#allocation2], 4
      %s1057 = int_to_ptr.vmem [resolvable:$true] %s1056
      %1059 = dma.vmem_to_hbm [thread:$0]  %s1057, 32, %s4, [#allocation3]
    $region21: #{mymodel_forward.1} parent=1 // pred_fallthru
      _
    // Predicated region
    $region22: #{mymodel_forward.1} parent=1 // pred_check
      _
    $region23: #{mymodel_forward.1} parent=1 // pred_check_branch
      %1061 = sbr.rel (0) target = $region25
    $region24: #{mymodel_forward.1} parent=1 // pred_region
      %1062 = dma.done [#allocation3], 32
    $region25: #{mymodel_forward.1} parent=1 // pred_fallthru
      _
    %1063 = vsyncpa [#allocation3], 1

</llo_original>
